<compile_context>
chip_gen: v5e
topology: v5e:2x2
jax: 0.10.0
libtpu: 0.0.40
codegen_flags: <defaults>
</compile_context>

<pallas_src>
import math

import numpy as np

import jax
import jax.numpy as jnp
from jax.experimental import pallas as pl
from jax.experimental.pallas import tpu as pltpu


# ----------------------------------------------------------------------------
# Weight construction (mirrors get_gaussian_kernel_2d / get_svls_filter_2d,
# with the final division by svls_kernel.sum() folded into the weights).
# ----------------------------------------------------------------------------
def build_svls_weights(ksize=3, sigma=1):
    ax = np.arange(ksize, dtype=np.float64)
    x_grid = np.tile(ax, ksize).reshape(ksize, ksize)
    y_grid = x_grid.T
    mean = (ksize - 1) / 2.0
    variance = float(sigma) ** 2.0
    g = (1.0 / (2.0 * math.pi * variance + 1e-16)) * np.exp(
        -((x_grid - mean) ** 2.0 + (y_grid - mean) ** 2.0) / (2.0 * variance + 1e-16)
    )
    g = g / g.sum()
    neighbors_sum = 1.0 - g[ksize // 2, ksize // 2] + 1e-16
    g[ksize // 2, ksize // 2] = neighbors_sum
    svls = g / neighbors_sum                 # the conv weights of the module
    ksum = svls.sum()                        # scalar divisor in forward()
    w = (svls / ksum).astype(np.float32)     # fold normalization into weights
    return [[float(w[i, j]) for j in range(ksize)] for i in range(ksize)]


def _round_up(v, m):
    return (v + m - 1) // m * m


def _choose_channel_block(ncp, H, W, pad, budget_bytes=8 << 20):
    """Largest multiple of 128 dividing ncp whose VMEM footprint fits a budget."""
    w8 = _round_up(W, 8)                 # sublane padding of the (W, C) tile
    wp8 = _round_up(W + 2 * pad, 8)      # sublane padding of the scratch slab
    bytes_per_channel = 4 * (
        2 * H * w8                       # double-buffered input block
        + 2 * H * w8                     # double-buffered output block
        + (H + 2 * pad) * wp8            # replicate-padded scratch
        + H * w8                         # f32 accumulator temporaries
    )
    tc = max(128, (budget_bytes // bytes_per_channel) // 128 * 128)
    tc = min(tc, ncp)
    while ncp % tc:
        tc -= 128
    # Prefer >= 2 grid steps when there is enough work (lets v7x use both TCs);
    # each block stays lane-dense and large, so this costs ~nothing elsewhere.
    if tc == ncp and ncp >= 256:
        tc = max(128, (ncp // 2) // 128 * 128)
        while ncp % tc:
            tc -= 128
    return tc


# ----------------------------------------------------------------------------
# Kernel: in-kernel replicate pad + 9-tap shift-and-accumulate (VPU only).
# ----------------------------------------------------------------------------
def _make_kernel(H, W, ksize, pad, weights):
    def kernel(x_ref, o_ref, xp_ref):
        # x_ref : (H, W, TC) VMEM input block (channels on the lane axis)
        # o_ref : (H, W, TC) VMEM output block
        # xp_ref: (H+2p, W+2p, TC) f32 VMEM scratch = replicate-padded block

        # Interior.
        xp_ref[pad:pad + H, pad:pad + W, :] = x_ref[...].astype(jnp.float32)
        # Top / bottom replicate rows (leading-dim offsets: free).
        for p in range(pad):
            xp_ref[p:p + 1, pad:pad + W, :] = x_ref[0:1, :, :].astype(jnp.float32)
            xp_ref[pad + H + p:pad + H + p + 1, pad:pad + W, :] = (
                x_ref[H - 1:H, :, :].astype(jnp.float32))
        # Left / right replicate columns (covers corners, since the padded
        # top/bottom rows were already filled above).
        for p in range(pad):
            xp_ref[:, p:p + 1, :] = xp_ref[:, pad:pad + 1, :]
            xp_ref[:, pad + W + p:pad + W + p + 1, :] = (
                xp_ref[:, pad + W - 1:pad + W, :])

        # 3x3 shift-and-accumulate; weights are compile-time float immediates
        # (normalization already folded in), taps are row/sublane offsets only.
        acc = None
        for di in range(ksize):
            for dj in range(ksize):
                term = weights[di][dj] * xp_ref[di:di + H, dj:dj + W, :]
                acc = term if acc is None else acc + term
        o_ref[...] = acc.astype(o_ref.dtype)

    return kernel


# ----------------------------------------------------------------------------
# Wrapper
# ----------------------------------------------------------------------------
def svls_filter_2d(x, ksize=3, sigma=1):
    """x: (N, C, H, W) float -> (N, C, H, W), matching get_svls_filter_2d.forward."""
    assert ksize % 2 == 1, "ksize must be odd (module assumes 'same'-style padding)"
    N, C, H, W = x.shape
    pad = ksize // 2
    weights = build_svls_weights(ksize=ksize, sigma=sigma)

    NC = N * C
    NCp = _round_up(NC, 128)                    # lane-dense channel axis
    TC = _choose_channel_block(NCp, H, W, pad)  # channels per grid step

    # Channels-last layout with channels (lane axis) padded to a 128 multiple.
    x_t = jnp.transpose(x, (2, 3, 0, 1)).reshape(H, W, NC)
    if NCp != NC:
        x_t = jnp.pad(x_t, ((0, 0), (0, 0), (0, NCp - NC)))

    Hp, Wp = H + 2 * pad, W + 2 * pad
    grid = (NCp // TC,)

    out_t = pl.pallas_call(
        _make_kernel(H, W, ksize, pad, weights),
        out_shape=jax.ShapeDtypeStruct((H, W, NCp), x.dtype),
        grid_spec=pltpu.PrefetchScalarGridSpec(
            num_scalar_prefetch=0,
            grid=grid,
            in_specs=[pl.BlockSpec((H, W, TC), lambda g: (0, 0, g))],
            out_specs=pl.BlockSpec((H, W, TC), lambda g: (0, 0, g)),
            scratch_shapes=[pltpu.VMEM((Hp, Wp, TC), jnp.float32)],
        ),
        compiler_params=pltpu.CompilerParams(
            dimension_semantics=("parallel",),
            vmem_limit_bytes=32 * 1024 * 1024,
        ),
        cost_estimate=pl.CostEstimate(
            flops=2 * ksize * ksize * H * W * NCp,
            transcendentals=0,
            bytes_accessed=2 * H * W * NCp * x.dtype.itemsize,
        ),
    )(x_t)

    out = out_t[:, :, :NC].reshape(H, W, N, C)
    return jnp.transpose(out, (2, 3, 0, 1))


# ----------------------------------------------------------------------------
# Pure-JAX reference (lax.conv) for a sanity check.
# ----------------------------------------------------------------------------
def _reference(x, ksize=3, sigma=1):
    N, C, H, W = x.shape
    pad = ksize // 2
    w2d = jnp.asarray(np.array(build_svls_weights(ksize, sigma), dtype=np.float32))
    x_pad = jnp.pad(x, ((0, 0), (0, 0), (pad, pad), (pad, pad)), mode="edge")
    w = jnp.broadcast_to(w2d[None, None], (C, 1, ksize, ksize))
    return jax.lax.conv_general_dilated(
        x_pad, w, window_strides=(1, 1), padding="VALID",
        feature_group_count=C, dimension_numbers=("NCHW", "OIHW", "NCHW"),
    )


if __name__ == "__main__":
    key = jax.random.PRNGKey(0)
    N, C, H, W = 2, 4, 16, 16
    x = jax.random.normal(key, (N, C, H, W), dtype=jnp.float32)

    y = svls_filter_2d(x, ksize=3, sigma=1)
    y = jax.block_until_ready(y)

    y_ref = _reference(x, ksize=3, sigma=1)
    assert y.shape == (N, C, H, W)
    assert jnp.allclose(y, y_ref, atol=1e-5, rtol=1e-5), float(
        jnp.max(jnp.abs(y - y_ref)))

    print("KERNEL_OK")
</pallas_src>

<mosaic_0001>
module attributes {stable_mosaic.version = 11 : i64} {
  func.func @kernel(%arg0: i32, %arg1: memref<16x16x128xf32, #tpu.memory_space<vmem>>, %arg2: memref<16x16x128xf32, #tpu.memory_space<vmem>>, %arg3: memref<18x18x128xf32, #tpu.memory_space<vmem>>) attributes {dimension_semantics = [#tpu.dimension_semantics<parallel>], iteration_bounds = array<i64: 1>, scalar_prefetch = 0 : i64, scratch_operands = 1 : i64, tpu.core_type = #tpu.core_type<tc>, window_params = [{transform_indices = @transform_0, window_bounds = array<i64: 16, 16, 128>}, {transform_indices = @transform_1, window_bounds = array<i64: 16, 16, 128>}]} {
    %c0 = arith.constant 0 : index
    %c0_0 = arith.constant 0 : index
    %c0_1 = arith.constant 0 : index
    %0 = vector.load %arg1[%c0, %c0_0, %c0_1] : memref<16x16x128xf32, #tpu.memory_space<vmem>>, vector<16x16x128xf32>
    %c1 = arith.constant 1 : index
    %c1_2 = arith.constant 1 : index
    %c0_3 = arith.constant 0 : index
    %1 = vector.load %arg3[%c1, %c1_2, %c0_3] : memref<18x18x128xf32, #tpu.memory_space<vmem>>, vector<16x16x128xf32>
    tpu.vector_store %arg3[%c1, %c1_2, %c0_3], %0 {strides = array<i32>} : memref<18x18x128xf32, #tpu.memory_space<vmem>>, vector<16x16x128xf32>,
    %c0_4 = arith.constant 0 : index
    %c0_5 = arith.constant 0 : index
    %c0_6 = arith.constant 0 : index
    %2 = vector.load %arg1[%c0_4, %c0_5, %c0_6] : memref<16x16x128xf32, #tpu.memory_space<vmem>>, vector<1x16x128xf32>
    %c0_7 = arith.constant 0 : index
    %c1_8 = arith.constant 1 : index
    %c0_9 = arith.constant 0 : index
    %3 = vector.load %arg3[%c0_7, %c1_8, %c0_9] : memref<18x18x128xf32, #tpu.memory_space<vmem>>, vector<1x16x128xf32>
    tpu.vector_store %arg3[%c0_7, %c1_8, %c0_9], %2 {strides = array<i32>} : memref<18x18x128xf32, #tpu.memory_space<vmem>>, vector<1x16x128xf32>,
    %c15 = arith.constant 15 : index
    %c0_10 = arith.constant 0 : index
    %c0_11 = arith.constant 0 : index
    %4 = vector.load %arg1[%c15, %c0_10, %c0_11] : memref<16x16x128xf32, #tpu.memory_space<vmem>>, vector<1x16x128xf32>
    %c17 = arith.constant 17 : index
    %c1_12 = arith.constant 1 : index
    %c0_13 = arith.constant 0 : index
    %5 = vector.load %arg3[%c17, %c1_12, %c0_13] : memref<18x18x128xf32, #tpu.memory_space<vmem>>, vector<1x16x128xf32>
    tpu.vector_store %arg3[%c17, %c1_12, %c0_13], %4 {strides = array<i32>} : memref<18x18x128xf32, #tpu.memory_space<vmem>>, vector<1x16x128xf32>,
    %c0_14 = arith.constant 0 : index
    %c1_15 = arith.constant 1 : index
    %c0_16 = arith.constant 0 : index
    %6 = vector.load %arg3[%c0_14, %c1_15, %c0_16] : memref<18x18x128xf32, #tpu.memory_space<vmem>>, vector<18x1x128xf32>
    %c0_17 = arith.constant 0 : index
    %c0_18 = arith.constant 0 : index
    %c0_19 = arith.constant 0 : index
    %7 = vector.load %arg3[%c0_17, %c0_18, %c0_19] : memref<18x18x128xf32, #tpu.memory_space<vmem>>, vector<18x1x128xf32>
    tpu.vector_store %arg3[%c0_17, %c0_18, %c0_19], %6 {strides = array<i32>} : memref<18x18x128xf32, #tpu.memory_space<vmem>>, vector<18x1x128xf32>,
    %c0_20 = arith.constant 0 : index
    %c16 = arith.constant 16 : index
    %c0_21 = arith.constant 0 : index
    %8 = vector.load %arg3[%c0_20, %c16, %c0_21] : memref<18x18x128xf32, #tpu.memory_space<vmem>>, vector<18x1x128xf32>
    %c0_22 = arith.constant 0 : index
    %c17_23 = arith.constant 17 : index
    %c0_24 = arith.constant 0 : index
    %9 = vector.load %arg3[%c0_22, %c17_23, %c0_24] : memref<18x18x128xf32, #tpu.memory_space<vmem>>, vector<18x1x128xf32>
    tpu.vector_store %arg3[%c0_22, %c17_23, %c0_24], %8 {strides = array<i32>} : memref<18x18x128xf32, #tpu.memory_space<vmem>>, vector<18x1x128xf32>,
    %c0_25 = arith.constant 0 : index
    %c0_26 = arith.constant 0 : index
    %c0_27 = arith.constant 0 : index
    %10 = vector.load %arg3[%c0_25, %c0_26, %c0_27] : memref<18x18x128xf32, #tpu.memory_space<vmem>>, vector<16x16x128xf32>
    %cst = arith.constant 0.0471925847 : f32
    %11 = vector.broadcast %cst : f32 to vector<16x16x128xf32>
    %12 = arith.mulf %11, %10 : vector<16x16x128xf32>
    %c0_28 = arith.constant 0 : index
    %c1_29 = arith.constant 1 : index
    %c0_30 = arith.constant 0 : index
    %13 = vector.load %arg3[%c0_28, %c1_29, %c0_30] : memref<18x18x128xf32, #tpu.memory_space<vmem>>, vector<16x16x128xf32>
    %cst_31 = arith.constant 0.077807419 : f32
    %14 = vector.broadcast %cst_31 : f32 to vector<16x16x128xf32>
    %15 = arith.mulf %14, %13 : vector<16x16x128xf32>
    %16 = arith.addf %12, %15 : vector<16x16x128xf32>
    %c0_32 = arith.constant 0 : index
    %c2 = arith.constant 2 : index
    %c0_33 = arith.constant 0 : index
    %17 = vector.load %arg3[%c0_32, %c2, %c0_33] : memref<18x18x128xf32, #tpu.memory_space<vmem>>, vector<16x16x128xf32>
    %cst_34 = arith.constant 0.0471925847 : f32
    %18 = vector.broadcast %cst_34 : f32 to vector<16x16x128xf32>
    %19 = arith.mulf %18, %17 : vector<16x16x128xf32>
    %20 = arith.addf %16, %19 : vector<16x16x128xf32>
    %c1_35 = arith.constant 1 : index
    %c0_36 = arith.constant 0 : index
    %c0_37 = arith.constant 0 : index
    %21 = vector.load %arg3[%c1_35, %c0_36, %c0_37] : memref<18x18x128xf32, #tpu.memory_space<vmem>>, vector<16x16x128xf32>
    %cst_38 = arith.constant 0.077807419 : f32
    %22 = vector.broadcast %cst_38 : f32 to vector<16x16x128xf32>
    %23 = arith.mulf %22, %21 : vector<16x16x128xf32>
    %24 = arith.addf %20, %23 : vector<16x16x128xf32>
    %c1_39 = arith.constant 1 : index
    %c1_40 = arith.constant 1 : index
    %c0_41 = arith.constant 0 : index
    %25 = vector.load %arg3[%c1_39, %c1_40, %c0_41] : memref<18x18x128xf32, #tpu.memory_space<vmem>>, vector<16x16x128xf32>
    %cst_42 = arith.constant 5.000000e-01 : f32
    %26 = vector.broadcast %cst_42 : f32 to vector<16x16x128xf32>
    %27 = arith.mulf %26, %25 : vector<16x16x128xf32>
    %28 = arith.addf %24, %27 : vector<16x16x128xf32>
    %c1_43 = arith.constant 1 : index
    %c2_44 = arith.constant 2 : index
    %c0_45 = arith.constant 0 : index
    %29 = vector.load %arg3[%c1_43, %c2_44, %c0_45] : memref<18x18x128xf32, #tpu.memory_space<vmem>>, vector<16x16x128xf32>
    %cst_46 = arith.constant 0.077807419 : f32
    %30 = vector.broadcast %cst_46 : f32 to vector<16x16x128xf32>
    %31 = arith.mulf %30, %29 : vector<16x16x128xf32>
    %32 = arith.addf %28, %31 : vector<16x16x128xf32>
    %c2_47 = arith.constant 2 : index
    %c0_48 = arith.constant 0 : index
    %c0_49 = arith.constant 0 : index
    %33 = vector.load %arg3[%c2_47, %c0_48, %c0_49] : memref<18x18x128xf32, #tpu.memory_space<vmem>>, vector<16x16x128xf32>
    %cst_50 = arith.constant 0.0471925847 : f32
    %34 = vector.broadcast %cst_50 : f32 to vector<16x16x128xf32>
    %35 = arith.mulf %34, %33 : vector<16x16x128xf32>
    %36 = arith.addf %32, %35 : vector<16x16x128xf32>
    %c2_51 = arith.constant 2 : index
    %c1_52 = arith.constant 1 : index
    %c0_53 = arith.constant 0 : index
    %37 = vector.load %arg3[%c2_51, %c1_52, %c0_53] : memref<18x18x128xf32, #tpu.memory_space<vmem>>, vector<16x16x128xf32>
    %cst_54 = arith.constant 0.077807419 : f32
    %38 = vector.broadcast %cst_54 : f32 to vector<16x16x128xf32>
    %39 = arith.mulf %38, %37 : vector<16x16x128xf32>
    %40 = arith.addf %36, %39 : vector<16x16x128xf32>
    %c2_55 = arith.constant 2 : index
    %c2_56 = arith.constant 2 : index
    %c0_57 = arith.constant 0 : index
    %41 = vector.load %arg3[%c2_55, %c2_56, %c0_57] : memref<18x18x128xf32, #tpu.memory_space<vmem>>, vector<16x16x128xf32>
    %cst_58 = arith.constant 0.0471925847 : f32
    %42 = vector.broadcast %cst_58 : f32 to vector<16x16x128xf32>
    %43 = arith.mulf %42, %41 : vector<16x16x128xf32>
    %44 = arith.addf %40, %43 : vector<16x16x128xf32>
    %c0_59 = arith.constant 0 : index
    %c0_60 = arith.constant 0 : index
    %c0_61 = arith.constant 0 : index
    %45 = vector.load %arg2[%c0_59, %c0_60, %c0_61] : memref<16x16x128xf32, #tpu.memory_space<vmem>>, vector<16x16x128xf32>
    tpu.vector_store %arg2[%c0_59, %c0_60, %c0_61], %44 {strides = array<i32>} : memref<16x16x128xf32, #tpu.memory_space<vmem>>, vector<16x16x128xf32>,
    return
  }
  func.func @transform_0(%arg0: i32) -> (i32, i32, i32) {
    %c0_i32 = arith.constant 0 : i32
    %c0_i32_0 = arith.constant 0 : i32
    %c0_i32_1 = arith.constant 0 : i32
    return %c0_i32, %c0_i32_0, %arg0 : i32, i32, i32
  }
  func.func @transform_1(%arg0: i32) -> (i32, i32, i32) {
    %c0_i32 = arith.constant 0 : i32
    %c0_i32_0 = arith.constant 0 : i32
    %c0_i32_1 = arith.constant 0 : i32
    return %c0_i32, %c0_i32_0, %arg0 : i32, i32, i32
  }
}

</mosaic_0001>

<llo_original>
// kernel: tpu_custom_call.1
$region0: #{tpu_custom_call.1}
  #allocation0 [shape = 'u32[]', space=smem, size = 0x4, offset = 0x4, fixed_abs, tag = 'smem constant byte address 0x4 - core index']
  #allocation1 [shape = 'u32[72,128]{1,0:T(1,128)}', space=vmem, size = 0x9000, scoped, tag = 'internal scratch']
  #allocation2 [shape = 'f32[18,18,128]{2,1,0:T(8,128)}', space=vmem, size = 0x36000, scoped, tag = 'scratch operand']
  %s0 = inlined_call_operand.hbm [shape: f32[16,16,128], index: 0, kind: input, shape index: {}]
  %s1 = inlined_call_operand.hbm [shape: f32[16,16,128], index: 1, kind: output, shape index: {}]
  %s2 = sld [smem:[#allocation0]]
  $region18: #{tpu_custom_call.1} parent=0
    _
  %s4 = ssub.s32 1, %s2
  %s5 = scalar_select 0, %s4, %s2
  $region1: #{tpu_custom_call.1} parent=0
    #allocation3 [shape = 'u8[131072]{0}', space=vmem, size = 0x20000, scoped, tag = 'input window, operand 0, single buffered']
    #allocation4 [shape = 's32[1]{0}', space=sflag, size = 0x4, scoped, tag = 'scoped memory for tpu_custom_call.1']
    #allocation5 [shape = 's32[1]{0}', space=sflag, size = 0x4, scoped, tag = 'scoped memory for tpu_custom_call.1']
    #allocation6 [shape = 'u8[131072]{0}', space=vmem, size = 0x20000, scoped, tag = 'output window, operand 0, single buffered']
    %6 = vsyncpa [#allocation4], 0
    %7 = vsyncpa [#allocation5], 0
    // Predicated region
    $region2: #{tpu_custom_call.1} parent=1 // pred_check
      _
    $region3: #{tpu_custom_call.1} parent=1 // pred_check_branch
      %9 = sbr.rel (0) target = $region5
    $region4: #{tpu_custom_call.1} parent=1 // pred_region
      %11 = vsyncadd [#allocation4], 0
      %s12 = sshll.u32 %s0, 4
      %s13 = int_to_ptr.hbm [resolvable:$true] %s12
      %s14 = sshll.u32 [#allocation3], 4
      %s15 = int_to_ptr.vmem [resolvable:$true] %s14
      %20 = dma.hbm_to_vmem [thread:$0]  %s13, 4096, %s15, [#allocation4], 128, 128, 8
    $region5: #{tpu_custom_call.1} parent=1 // pred_fallthru
      _
    // Predicated region
    $region6: #{tpu_custom_call.1} parent=1 // pred_check
      _
    $region7: #{tpu_custom_call.1} parent=1 // pred_check_branch
      %22 = sbr.rel (0) target = $region9
    $region8: #{tpu_custom_call.1} parent=1 // pred_region
      %24 = dma.done [#allocation4], 4096
    $region9: #{tpu_custom_call.1} parent=1 // pred_fallthru
      _
    %v25 = vld [vmem:[#allocation3] sm:$0xff]
    %v26 = vld [vmem:[#allocation3 + $0x8] sm:$0xff]
    %v27 = vld [vmem:[#allocation3 + $0x10] sm:$0xff]
    %v28 = vld [vmem:[#allocation3 + $0x18] sm:$0xff]
    %v29 = vld [vmem:[#allocation3 + $0x20] sm:$0xff]
    %v30 = vld [vmem:[#allocation3 + $0x28] sm:$0xff]
    %v31 = vld [vmem:[#allocation3 + $0x30] sm:$0xff]
    %v32 = vld [vmem:[#allocation3 + $0x38] sm:$0xff]
    %v33 = vld [vmem:[#allocation3 + $0x40] sm:$0xff]
    %v34 = vld [vmem:[#allocation3 + $0x48] sm:$0xff]
    %v35 = vld [vmem:[#allocation3 + $0x50] sm:$0xff]
    %v36 = vld [vmem:[#allocation3 + $0x58] sm:$0xff]
    %v37 = vld [vmem:[#allocation3 + $0x60] sm:$0xff]
    %v38 = vld [vmem:[#allocation3 + $0x68] sm:$0xff]
    %v39 = vld [vmem:[#allocation3 + $0x70] sm:$0xff]
    %v40 = vld [vmem:[#allocation3 + $0x78] sm:$0xff]
    %v41 = vld [vmem:[#allocation3 + $0x80] sm:$0xff]
    %v42 = vld [vmem:[#allocation3 + $0x88] sm:$0xff]
    %v43 = vld [vmem:[#allocation3 + $0x90] sm:$0xff]
    %v44 = vld [vmem:[#allocation3 + $0x98] sm:$0xff]
    %v45 = vld [vmem:[#allocation3 + $0xa0] sm:$0xff]
    %v46 = vld [vmem:[#allocation3 + $0xa8] sm:$0xff]
    %v47 = vld [vmem:[#allocation3 + $0xb0] sm:$0xff]
    %v48 = vld [vmem:[#allocation3 + $0xb8] sm:$0xff]
    %v49 = vld [vmem:[#allocation3 + $0xc0] sm:$0xff]
    %v50 = vld [vmem:[#allocation3 + $0xc8] sm:$0xff]
    %v51 = vld [vmem:[#allocation3 + $0xd0] sm:$0xff]
    %v52 = vld [vmem:[#allocation3 + $0xd8] sm:$0xff]
    %v53 = vld [vmem:[#allocation3 + $0xe0] sm:$0xff]
    %v54 = vld [vmem:[#allocation3 + $0xe8] sm:$0xff]
    %v55 = vld [vmem:[#allocation3 + $0xf0] sm:$0xff]
    %v56 = vld [vmem:[#allocation3 + $0xf8] sm:$0xff]
    %s57 = scalar_lea.vmem [#allocation2], 24
    %58 = vst [vmem:[%s57 + $0x1] sm:$0xff] %v25
    %59 = vst [vmem:[%s57 + $0x9] sm:$0xff] %v26
    %60 = vst [vmem:[%s57 + $0x19] sm:$0xff] %v27
    %61 = vst [vmem:[%s57 + $0x21] sm:$0xff] %v28
    %62 = vst [vmem:[%s57 + $0x31] sm:$0xff] %v29
    %63 = vst [vmem:[%s57 + $0x39] sm:$0xff] %v30
    %64 = vst [vmem:[%s57 + $0x49] sm:$0xff] %v31
    %65 = vst [vmem:[%s57 + $0x51] sm:$0xff] %v32
    %66 = vst [vmem:[%s57 + $0x61] sm:$0xff] %v33
    %67 = vst [vmem:[%s57 + $0x69] sm:$0xff] %v34
    %68 = vst [vmem:[%s57 + $0x79] sm:$0xff] %v35
    %69 = vst [vmem:[%s57 + $0x81] sm:$0xff] %v36
    %70 = vst [vmem:[%s57 + $0x91] sm:$0xff] %v37
    %71 = vst [vmem:[%s57 + $0x99] sm:$0xff] %v38
    %72 = vst [vmem:[%s57 + $0xa9] sm:$0xff] %v39
    %73 = vst [vmem:[%s57 + $0xb1] sm:$0xff] %v40
    %74 = vst [vmem:[%s57 + $0xc1] sm:$0xff] %v41
    %75 = vst [vmem:[%s57 + $0xc9] sm:$0xff] %v42
    %76 = vst [vmem:[%s57 + $0xd9] sm:$0xff] %v43
    %77 = vst [vmem:[%s57 + $0xe1] sm:$0xff] %v44
    %78 = vst [vmem:[%s57 + $0xf1] sm:$0xff] %v45
    %79 = vst [vmem:[%s57 + $0xf9] sm:$0xff] %v46
    %80 = vst [vmem:[%s57 + $0x109] sm:$0xff] %v47
    %81 = vst [vmem:[%s57 + $0x111] sm:$0xff] %v48
    %82 = vst [vmem:[%s57 + $0x121] sm:$0xff] %v49
    %83 = vst [vmem:[%s57 + $0x129] sm:$0xff] %v50
    %84 = vst [vmem:[%s57 + $0x139] sm:$0xff] %v51
    %85 = vst [vmem:[%s57 + $0x141] sm:$0xff] %v52
    %86 = vst [vmem:[%s57 + $0x151] sm:$0xff] %v53
    %87 = vst [vmem:[%s57 + $0x159] sm:$0xff] %v54
    %88 = vst [vmem:[%s57 + $0x169] sm:$0xff] %v55
    %89 = vst [vmem:[%s57 + $0x171] sm:$0xff] %v56
    %v90 = vld [vmem:[#allocation3] sm:$0xff]
    %v91 = vld [vmem:[#allocation3 + $0x8] sm:$0xff]
    %92 = vst [vmem:[#allocation2 + $0x1] sm:$0xff] %v90
    %93 = vst [vmem:[#allocation2 + $0x9] sm:$0xff] %v91
    %s94 = scalar_lea.vmem [#allocation3], 240
    %v95 = vld [vmem:[%s94] sm:$0xff]
    %v96 = vld [vmem:[%s94 + $0x8] sm:$0xff]
    %s97 = scalar_lea.vmem [#allocation2], 408
    %98 = vst [vmem:[%s97 + $0x1] sm:$0xff] %v95
    %99 = vst [vmem:[%s97 + $0x9] sm:$0xff] %v96
    %v100 = vld [vmem:[#allocation2 + $0x1] sm:$0x1]
    %v101 = vld [vmem:[#allocation2 + $0x19] sm:$0x1]
    %v102 = vld [vmem:[#allocation2 + $0x31] sm:$0x1]
    %v103 = vld [vmem:[#allocation2 + $0x49] sm:$0x1]
    %v104 = vld [vmem:[#allocation2 + $0x61] sm:$0x1]
    %v105 = vld [vmem:[#allocation2 + $0x79] sm:$0x1]
    %v106 = vld [vmem:[#allocation2 + $0x91] sm:$0x1]
    %v107 = vld [vmem:[#allocation2 + $0xa9] sm:$0x1]
    %v108 = vld [vmem:[#allocation2 + $0xc1] sm:$0x1]
    %v109 = vld [vmem:[#allocation2 + $0xd9] sm:$0x1]
    %v110 = vld [vmem:[#allocation2 + $0xf1] sm:$0x1]
    %v111 = vld [vmem:[#allocation2 + $0x109] sm:$0x1]
    %v112 = vld [vmem:[#allocation2 + $0x121] sm:$0x1]
    %v113 = vld [vmem:[#allocation2 + $0x139] sm:$0x1]
    %v114 = vld [vmem:[#allocation2 + $0x151] sm:$0x1]
    %v115 = vld [vmem:[#allocation2 + $0x169] sm:$0x1]
    %v116 = vld [vmem:[#allocation2 + $0x181] sm:$0x1]
    %v117 = vld [vmem:[#allocation2 + $0x199] sm:$0x1]
    %118 = vst [vmem:[#allocation2] sm:$0x1] %v100
    %119 = vst [vmem:[#allocation2 + $0x18] sm:$0x1] %v101
    %120 = vst [vmem:[#allocation2 + $0x30] sm:$0x1] %v102
    %121 = vst [vmem:[#allocation2 + $0x48] sm:$0x1] %v103
    %122 = vst [vmem:[#allocation2 + $0x60] sm:$0x1] %v104
    %123 = vst [vmem:[#allocation2 + $0x78] sm:$0x1] %v105
    %124 = vst [vmem:[#allocation2 + $0x90] sm:$0x1] %v106
    %125 = vst [vmem:[#allocation2 + $0xa8] sm:$0x1] %v107
    %126 = vst [vmem:[#allocation2 + $0xc0] sm:$0x1] %v108
    %127 = vst [vmem:[#allocation2 + $0xd8] sm:$0x1] %v109
    %128 = vst [vmem:[#allocation2 + $0xf0] sm:$0x1] %v110
    %129 = vst [vmem:[#allocation2 + $0x108] sm:$0x1] %v111
    %130 = vst [vmem:[#allocation2 + $0x120] sm:$0x1] %v112
    %131 = vst [vmem:[#allocation2 + $0x138] sm:$0x1] %v113
    %132 = vst [vmem:[#allocation2 + $0x150] sm:$0x1] %v114
    %133 = vst [vmem:[#allocation2 + $0x168] sm:$0x1] %v115
    %134 = vst [vmem:[#allocation2 + $0x180] sm:$0x1] %v116
    %135 = vst [vmem:[#allocation2 + $0x198] sm:$0x1] %v117
    %v136 = vld [vmem:[#allocation2 + $0x10] sm:$0x1]
    %v137 = vld [vmem:[#allocation2 + $0x28] sm:$0x1]
    %v138 = vld [vmem:[#allocation2 + $0x40] sm:$0x1]
    %v139 = vld [vmem:[#allocation2 + $0x58] sm:$0x1]
    %v140 = vld [vmem:[#allocation2 + $0x70] sm:$0x1]
    %v141 = vld [vmem:[#allocation2 + $0x88] sm:$0x1]
    %v142 = vld [vmem:[#allocation2 + $0xa0] sm:$0x1]
    %v143 = vld [vmem:[#allocation2 + $0xb8] sm:$0x1]
    %v144 = vld [vmem:[#allocation2 + $0xd0] sm:$0x1]
    %v145 = vld [vmem:[#allocation2 + $0xe8] sm:$0x1]
    %v146 = vld [vmem:[#allocation2 + $0x100] sm:$0x1]
    %v147 = vld [vmem:[#allocation2 + $0x118] sm:$0x1]
    %v148 = vld [vmem:[#allocation2 + $0x130] sm:$0x1]
    %v149 = vld [vmem:[#allocation2 + $0x148] sm:$0x1]
    %v150 = vld [vmem:[#allocation2 + $0x160] sm:$0x1]
    %v151 = vld [vmem:[#allocation2 + $0x178] sm:$0x1]
    %v152 = vld [vmem:[#allocation2 + $0x190] sm:$0x1]
    %v153 = vld [vmem:[#allocation2 + $0x1a8] sm:$0x1]
    %154 = vst [vmem:[#allocation2 + $0x11] sm:$0x1] %v136
    %155 = vst [vmem:[#allocation2 + $0x29] sm:$0x1] %v137
    %156 = vst [vmem:[#allocation2 + $0x41] sm:$0x1] %v138
    %157 = vst [vmem:[#allocation2 + $0x59] sm:$0x1] %v139
    %158 = vst [vmem:[#allocation2 + $0x71] sm:$0x1] %v140
    %159 = vst [vmem:[#allocation2 + $0x89] sm:$0x1] %v141
    %160 = vst [vmem:[#allocation2 + $0xa1] sm:$0x1] %v142
    %161 = vst [vmem:[#allocation2 + $0xb9] sm:$0x1] %v143
    %162 = vst [vmem:[#allocation2 + $0xd1] sm:$0x1] %v144
    %163 = vst [vmem:[#allocation2 + $0xe9] sm:$0x1] %v145
    %164 = vst [vmem:[#allocation2 + $0x101] sm:$0x1] %v146
    %165 = vst [vmem:[#allocation2 + $0x119] sm:$0x1] %v147
    %166 = vst [vmem:[#allocation2 + $0x131] sm:$0x1] %v148
    %167 = vst [vmem:[#allocation2 + $0x149] sm:$0x1] %v149
    %168 = vst [vmem:[#allocation2 + $0x161] sm:$0x1] %v150
    %169 = vst [vmem:[#allocation2 + $0x179] sm:$0x1] %v151
    %170 = vst [vmem:[#allocation2 + $0x191] sm:$0x1] %v152
    %171 = vst [vmem:[#allocation2 + $0x1a9] sm:$0x1] %v153
    %v172 = vld [vmem:[#allocation2] sm:$0xff]
    %v173 = vld [vmem:[#allocation2 + $0x8] sm:$0xff]
    %v174 = vld [vmem:[#allocation2 + $0x18] sm:$0xff]
    %v175 = vld [vmem:[#allocation2 + $0x20] sm:$0xff]
    %v176 = vld [vmem:[#allocation2 + $0x30] sm:$0xff]
    %v177 = vld [vmem:[#allocation2 + $0x38] sm:$0xff]
    %v178 = vld [vmem:[#allocation2 + $0x48] sm:$0xff]
    %v179 = vld [vmem:[#allocation2 + $0x50] sm:$0xff]
    %v180 = vld [vmem:[#allocation2 + $0x60] sm:$0xff]
    %v181 = vld [vmem:[#allocation2 + $0x68] sm:$0xff]
    %v182 = vld [vmem:[#allocation2 + $0x78] sm:$0xff]
    %v183 = vld [vmem:[#allocation2 + $0x80] sm:$0xff]
    %v184 = vld [vmem:[#allocation2 + $0x90] sm:$0xff]
    %v185 = vld [vmem:[#allocation2 + $0x98] sm:$0xff]
    %v186 = vld [vmem:[#allocation2 + $0xa8] sm:$0xff]
    %v187 = vld [vmem:[#allocation2 + $0xb0] sm:$0xff]
    %v188 = vld [vmem:[#allocation2 + $0xc0] sm:$0xff]
    %v189 = vld [vmem:[#allocation2 + $0xc8] sm:$0xff]
    %v190 = vld [vmem:[#allocation2 + $0xd8] sm:$0xff]
    %v191 = vld [vmem:[#allocation2 + $0xe0] sm:$0xff]
    %v192 = vld [vmem:[#allocation2 + $0xf0] sm:$0xff]
    %v193 = vld [vmem:[#allocation2 + $0xf8] sm:$0xff]
    %v194 = vld [vmem:[#allocation2 + $0x108] sm:$0xff]
    %v195 = vld [vmem:[#allocation2 + $0x110] sm:$0xff]
    %v196 = vld [vmem:[#allocation2 + $0x120] sm:$0xff]
    %v197 = vld [vmem:[#allocation2 + $0x128] sm:$0xff]
    %v198 = vld [vmem:[#allocation2 + $0x138] sm:$0xff]
    %v199 = vld [vmem:[#allocation2 + $0x140] sm:$0xff]
    %v200 = vld [vmem:[#allocation2 + $0x150] sm:$0xff]
    %v201 = vld [vmem:[#allocation2 + $0x158] sm:$0xff]
    %v202 = vld [vmem:[#allocation2 + $0x168] sm:$0xff]
    %v203 = vld [vmem:[#allocation2 + $0x170] sm:$0xff]
    %v204 = vmul.f32 %v172, 0.047192585
    %v205 = vmul.f32 %v173, 0.047192585
    %v206 = vmul.f32 %v174, 0.047192585
    %v207 = vmul.f32 %v175, 0.047192585
    %v208 = vmul.f32 %v176, 0.047192585
    %v209 = vmul.f32 %v177, 0.047192585
    %v210 = vmul.f32 %v178, 0.047192585
    %v211 = vmul.f32 %v179, 0.047192585
    %v212 = vmul.f32 %v180, 0.047192585
    %v213 = vmul.f32 %v181, 0.047192585
    %v214 = vmul.f32 %v182, 0.047192585
    %v215 = vmul.f32 %v183, 0.047192585
    %v216 = vmul.f32 %v184, 0.047192585
    %v217 = vmul.f32 %v185, 0.047192585
    %v218 = vmul.f32 %v186, 0.047192585
    %v219 = vmul.f32 %v187, 0.047192585
    %v220 = vmul.f32 %v188, 0.047192585
    %v221 = vmul.f32 %v189, 0.047192585
    %v222 = vmul.f32 %v190, 0.047192585
    %v223 = vmul.f32 %v191, 0.047192585
    %v224 = vmul.f32 %v192, 0.047192585
    %v225 = vmul.f32 %v193, 0.047192585
    %v226 = vmul.f32 %v194, 0.047192585
    %v227 = vmul.f32 %v195, 0.047192585
    %v228 = vmul.f32 %v196, 0.047192585
    %v229 = vmul.f32 %v197, 0.047192585
    %v230 = vmul.f32 %v198, 0.047192585
    %v231 = vmul.f32 %v199, 0.047192585
    %v232 = vmul.f32 %v200, 0.047192585
    %v233 = vmul.f32 %v201, 0.047192585
    %v234 = vmul.f32 %v202, 0.047192585
    %v235 = vmul.f32 %v203, 0.047192585
    %v236 = vld [vmem:[#allocation2 + $0x1] sm:$0xff]
    %v237 = vld [vmem:[#allocation2 + $0x9] sm:$0xff]
    %v238 = vld [vmem:[#allocation2 + $0x19] sm:$0xff]
    %v239 = vld [vmem:[#allocation2 + $0x21] sm:$0xff]
    %v240 = vld [vmem:[#allocation2 + $0x31] sm:$0xff]
    %v241 = vld [vmem:[#allocation2 + $0x39] sm:$0xff]
    %v242 = vld [vmem:[#allocation2 + $0x49] sm:$0xff]
    %v243 = vld [vmem:[#allocation2 + $0x51] sm:$0xff]
    %v244 = vld [vmem:[#allocation2 + $0x61] sm:$0xff]
    %v245 = vld [vmem:[#allocation2 + $0x69] sm:$0xff]
    %v246 = vld [vmem:[#allocation2 + $0x79] sm:$0xff]
    %v247 = vld [vmem:[#allocation2 + $0x81] sm:$0xff]
    %v248 = vld [vmem:[#allocation2 + $0x91] sm:$0xff]
    %v249 = vld [vmem:[#allocation2 + $0x99] sm:$0xff]
    %v250 = vld [vmem:[#allocation2 + $0xa9] sm:$0xff]
    %v251 = vld [vmem:[#allocation2 + $0xb1] sm:$0xff]
    %v252 = vld [vmem:[#allocation2 + $0xc1] sm:$0xff]
    %v253 = vld [vmem:[#allocation2 + $0xc9] sm:$0xff]
    %v254 = vld [vmem:[#allocation2 + $0xd9] sm:$0xff]
    %v255 = vld [vmem:[#allocation2 + $0xe1] sm:$0xff]
    %v256 = vld [vmem:[#allocation2 + $0xf1] sm:$0xff]
    %v257 = vld [vmem:[#allocation2 + $0xf9] sm:$0xff]
    %v258 = vld [vmem:[#allocation2 + $0x109] sm:$0xff]
    %v259 = vld [vmem:[#allocation2 + $0x111] sm:$0xff]
    %v260 = vld [vmem:[#allocation2 + $0x121] sm:$0xff]
    %v261 = vld [vmem:[#allocation2 + $0x129] sm:$0xff]
    %v262 = vld [vmem:[#allocation2 + $0x139] sm:$0xff]
    %v263 = vld [vmem:[#allocation2 + $0x141] sm:$0xff]
    %v264 = vld [vmem:[#allocation2 + $0x151] sm:$0xff]
    %v265 = vld [vmem:[#allocation2 + $0x159] sm:$0xff]
    %v266 = vld [vmem:[#allocation2 + $0x169] sm:$0xff]
    %v267 = vld [vmem:[#allocation2 + $0x171] sm:$0xff]
    %v268 = vmul.f32 %v236, 0.07780742
    %v269 = vmul.f32 %v237, 0.07780742
    %v270 = vmul.f32 %v238, 0.07780742
    %v271 = vmul.f32 %v239, 0.07780742
    %v272 = vmul.f32 %v240, 0.07780742
    %v273 = vmul.f32 %v241, 0.07780742
    %v274 = vmul.f32 %v242, 0.07780742
    %v275 = vmul.f32 %v243, 0.07780742
    %v276 = vmul.f32 %v244, 0.07780742
    %v277 = vmul.f32 %v245, 0.07780742
    %v278 = vmul.f32 %v246, 0.07780742
    %v279 = vmul.f32 %v247, 0.07780742
    %v280 = vmul.f32 %v248, 0.07780742
    %v281 = vmul.f32 %v249, 0.07780742
    %v282 = vmul.f32 %v250, 0.07780742
    %v283 = vmul.f32 %v251, 0.07780742
    %v284 = vmul.f32 %v252, 0.07780742
    %v285 = vmul.f32 %v253, 0.07780742
    %v286 = vmul.f32 %v254, 0.07780742
    %v287 = vmul.f32 %v255, 0.07780742
    %v288 = vmul.f32 %v256, 0.07780742
    %v289 = vmul.f32 %v257, 0.07780742
    %v290 = vmul.f32 %v258, 0.07780742
    %v291 = vmul.f32 %v259, 0.07780742
    %v292 = vmul.f32 %v260, 0.07780742
    %v293 = vmul.f32 %v261, 0.07780742
    %v294 = vmul.f32 %v262, 0.07780742
    %v295 = vmul.f32 %v263, 0.07780742
    %v296 = vmul.f32 %v264, 0.07780742
    %v297 = vmul.f32 %v265, 0.07780742
    %v298 = vmul.f32 %v266, 0.07780742
    %v299 = vmul.f32 %v267, 0.07780742
    %v300 = vadd.f32 %v204, %v268
    %v301 = vadd.f32 %v205, %v269
    %v302 = vadd.f32 %v206, %v270
    %v303 = vadd.f32 %v207, %v271
    %v304 = vadd.f32 %v208, %v272
    %v305 = vadd.f32 %v209, %v273
    %v306 = vadd.f32 %v210, %v274
    %v307 = vadd.f32 %v211, %v275
    %v308 = vadd.f32 %v212, %v276
    %v309 = vadd.f32 %v213, %v277
    %v310 = vadd.f32 %v214, %v278
    %v311 = vadd.f32 %v215, %v279
    %v312 = vadd.f32 %v216, %v280
    %v313 = vadd.f32 %v217, %v281
    %v314 = vadd.f32 %v218, %v282
    %v315 = vadd.f32 %v219, %v283
    %v316 = vadd.f32 %v220, %v284
    %v317 = vadd.f32 %v221, %v285
    %v318 = vadd.f32 %v222, %v286
    %v319 = vadd.f32 %v223, %v287
    %v320 = vadd.f32 %v224, %v288
    %v321 = vadd.f32 %v225, %v289
    %v322 = vadd.f32 %v226, %v290
    %v323 = vadd.f32 %v227, %v291
    %v324 = vadd.f32 %v228, %v292
    %v325 = vadd.f32 %v229, %v293
    %v326 = vadd.f32 %v230, %v294
    %v327 = vadd.f32 %v231, %v295
    %v328 = vadd.f32 %v232, %v296
    %v329 = vadd.f32 %v233, %v297
    %v330 = vadd.f32 %v234, %v298
    %v331 = vadd.f32 %v235, %v299
    %v332 = vld [vmem:[#allocation2 + $0x2] sm:$0xff]
    %v333 = vld [vmem:[#allocation2 + $0xa] sm:$0xff]
    %v334 = vld [vmem:[#allocation2 + $0x1a] sm:$0xff]
    %v335 = vld [vmem:[#allocation2 + $0x22] sm:$0xff]
    %v336 = vld [vmem:[#allocation2 + $0x32] sm:$0xff]
    %v337 = vld [vmem:[#allocation2 + $0x3a] sm:$0xff]
    %v338 = vld [vmem:[#allocation2 + $0x4a] sm:$0xff]
    %v339 = vld [vmem:[#allocation2 + $0x52] sm:$0xff]
    %v340 = vld [vmem:[#allocation2 + $0x62] sm:$0xff]
    %v341 = vld [vmem:[#allocation2 + $0x6a] sm:$0xff]
    %v342 = vld [vmem:[#allocation2 + $0x7a] sm:$0xff]
    %v343 = vld [vmem:[#allocation2 + $0x82] sm:$0xff]
    %v344 = vld [vmem:[#allocation2 + $0x92] sm:$0xff]
    %v345 = vld [vmem:[#allocation2 + $0x9a] sm:$0xff]
    %v346 = vld [vmem:[#allocation2 + $0xaa] sm:$0xff]
    %v347 = vld [vmem:[#allocation2 + $0xb2] sm:$0xff]
    %v348 = vld [vmem:[#allocation2 + $0xc2] sm:$0xff]
    %v349 = vld [vmem:[#allocation2 + $0xca] sm:$0xff]
    %v350 = vld [vmem:[#allocation2 + $0xda] sm:$0xff]
    %v351 = vld [vmem:[#allocation2 + $0xe2] sm:$0xff]
    %v352 = vld [vmem:[#allocation2 + $0xf2] sm:$0xff]
    %v353 = vld [vmem:[#allocation2 + $0xfa] sm:$0xff]
    %v354 = vld [vmem:[#allocation2 + $0x10a] sm:$0xff]
    %v355 = vld [vmem:[#allocation2 + $0x112] sm:$0xff]
    %v356 = vld [vmem:[#allocation2 + $0x122] sm:$0xff]
    %v357 = vld [vmem:[#allocation2 + $0x12a] sm:$0xff]
    %v358 = vld [vmem:[#allocation2 + $0x13a] sm:$0xff]
    %v359 = vld [vmem:[#allocation2 + $0x142] sm:$0xff]
    %v360 = vld [vmem:[#allocation2 + $0x152] sm:$0xff]
    %v361 = vld [vmem:[#allocation2 + $0x15a] sm:$0xff]
    %v362 = vld [vmem:[#allocation2 + $0x16a] sm:$0xff]
    %v363 = vld [vmem:[#allocation2 + $0x172] sm:$0xff]
    %v364 = vmul.f32 %v332, 0.047192585
    %v365 = vmul.f32 %v333, 0.047192585
    %v366 = vmul.f32 %v334, 0.047192585
    %v367 = vmul.f32 %v335, 0.047192585
    %v368 = vmul.f32 %v336, 0.047192585
    %v369 = vmul.f32 %v337, 0.047192585
    %v370 = vmul.f32 %v338, 0.047192585
    %v371 = vmul.f32 %v339, 0.047192585
    %v372 = vmul.f32 %v340, 0.047192585
    %v373 = vmul.f32 %v341, 0.047192585
    %v374 = vmul.f32 %v342, 0.047192585
    %v375 = vmul.f32 %v343, 0.047192585
    %v376 = vmul.f32 %v344, 0.047192585
    %v377 = vmul.f32 %v345, 0.047192585
    %v378 = vmul.f32 %v346, 0.047192585
    %v379 = vmul.f32 %v347, 0.047192585
    %v380 = vmul.f32 %v348, 0.047192585
    %v381 = vmul.f32 %v349, 0.047192585
    %v382 = vmul.f32 %v350, 0.047192585
    %v383 = vmul.f32 %v351, 0.047192585
    %v384 = vmul.f32 %v352, 0.047192585
    %v385 = vmul.f32 %v353, 0.047192585
    %v386 = vmul.f32 %v354, 0.047192585
    %v387 = vmul.f32 %v355, 0.047192585
    %v388 = vmul.f32 %v356, 0.047192585
    %v389 = vmul.f32 %v357, 0.047192585
    %v390 = vmul.f32 %v358, 0.047192585
    %v391 = vmul.f32 %v359, 0.047192585
    %v392 = vmul.f32 %v360, 0.047192585
    %v393 = vmul.f32 %v361, 0.047192585
    %v394 = vmul.f32 %v362, 0.047192585
    %v395 = vmul.f32 %v363, 0.047192585
    %v396 = vadd.f32 %v300, %v364
    %v397 = vadd.f32 %v301, %v365
    %v398 = vadd.f32 %v302, %v366
    %v399 = vadd.f32 %v303, %v367
    %v400 = vadd.f32 %v304, %v368
    %v401 = vadd.f32 %v305, %v369
    %v402 = vadd.f32 %v306, %v370
    %v403 = vadd.f32 %v307, %v371
    %v404 = vadd.f32 %v308, %v372
    %v405 = vadd.f32 %v309, %v373
    %v406 = vadd.f32 %v310, %v374
    %v407 = vadd.f32 %v311, %v375
    %v408 = vadd.f32 %v312, %v376
    %v409 = vadd.f32 %v313, %v377
    %v410 = vadd.f32 %v314, %v378
    %v411 = vadd.f32 %v315, %v379
    %v412 = vadd.f32 %v316, %v380
    %v413 = vadd.f32 %v317, %v381
    %v414 = vadd.f32 %v318, %v382
    %v415 = vadd.f32 %v319, %v383
    %v416 = vadd.f32 %v320, %v384
    %v417 = vadd.f32 %v321, %v385
    %v418 = vadd.f32 %v322, %v386
    %v419 = vadd.f32 %v323, %v387
    %v420 = vadd.f32 %v324, %v388
    %v421 = vadd.f32 %v325, %v389
    %v422 = vadd.f32 %v326, %v390
    %v423 = vadd.f32 %v327, %v391
    %v424 = vadd.f32 %v328, %v392
    %v425 = vadd.f32 %v329, %v393
    %v426 = vadd.f32 %v330, %v394
    %v427 = vadd.f32 %v331, %v395
    %v428 = vld [vmem:[%s57] sm:$0xff]
    %v429 = vld [vmem:[%s57 + $0x8] sm:$0xff]
    %v430 = vld [vmem:[%s57 + $0x18] sm:$0xff]
    %v431 = vld [vmem:[%s57 + $0x20] sm:$0xff]
    %v432 = vld [vmem:[%s57 + $0x30] sm:$0xff]
    %v433 = vld [vmem:[%s57 + $0x38] sm:$0xff]
    %v434 = vld [vmem:[%s57 + $0x48] sm:$0xff]
    %v435 = vld [vmem:[%s57 + $0x50] sm:$0xff]
    %v436 = vld [vmem:[%s57 + $0x60] sm:$0xff]
    %v437 = vld [vmem:[%s57 + $0x68] sm:$0xff]
    %v438 = vld [vmem:[%s57 + $0x78] sm:$0xff]
    %v439 = vld [vmem:[%s57 + $0x80] sm:$0xff]
    %v440 = vld [vmem:[%s57 + $0x90] sm:$0xff]
    %v441 = vld [vmem:[%s57 + $0x98] sm:$0xff]
    %v442 = vld [vmem:[%s57 + $0xa8] sm:$0xff]
    %v443 = vld [vmem:[%s57 + $0xb0] sm:$0xff]
    %v444 = vld [vmem:[%s57 + $0xc0] sm:$0xff]
    %v445 = vld [vmem:[%s57 + $0xc8] sm:$0xff]
    %v446 = vld [vmem:[%s57 + $0xd8] sm:$0xff]
    %v447 = vld [vmem:[%s57 + $0xe0] sm:$0xff]
    %v448 = vld [vmem:[%s57 + $0xf0] sm:$0xff]
    %v449 = vld [vmem:[%s57 + $0xf8] sm:$0xff]
    %v450 = vld [vmem:[%s57 + $0x108] sm:$0xff]
    %v451 = vld [vmem:[%s57 + $0x110] sm:$0xff]
    %v452 = vld [vmem:[%s57 + $0x120] sm:$0xff]
    %v453 = vld [vmem:[%s57 + $0x128] sm:$0xff]
    %v454 = vld [vmem:[%s57 + $0x138] sm:$0xff]
    %v455 = vld [vmem:[%s57 + $0x140] sm:$0xff]
    %v456 = vld [vmem:[%s57 + $0x150] sm:$0xff]
    %v457 = vld [vmem:[%s57 + $0x158] sm:$0xff]
    %v458 = vld [vmem:[%s57 + $0x168] sm:$0xff]
    %v459 = vld [vmem:[%s57 + $0x170] sm:$0xff]
    %v460 = vmul.f32 %v428, 0.07780742
    %v461 = vmul.f32 %v429, 0.07780742
    %v462 = vmul.f32 %v430, 0.07780742
    %v463 = vmul.f32 %v431, 0.07780742
    %v464 = vmul.f32 %v432, 0.07780742
    %v465 = vmul.f32 %v433, 0.07780742
    %v466 = vmul.f32 %v434, 0.07780742
    %v467 = vmul.f32 %v435, 0.07780742
    %v468 = vmul.f32 %v436, 0.07780742
    %v469 = vmul.f32 %v437, 0.07780742
    %v470 = vmul.f32 %v438, 0.07780742
    %v471 = vmul.f32 %v439, 0.07780742
    %v472 = vmul.f32 %v440, 0.07780742
    %v473 = vmul.f32 %v441, 0.07780742
    %v474 = vmul.f32 %v442, 0.07780742
    %v475 = vmul.f32 %v443, 0.07780742
    %v476 = vmul.f32 %v444, 0.07780742
    %v477 = vmul.f32 %v445, 0.07780742
    %v478 = vmul.f32 %v446, 0.07780742
    %v479 = vmul.f32 %v447, 0.07780742
    %v480 = vmul.f32 %v448, 0.07780742
    %v481 = vmul.f32 %v449, 0.07780742
    %v482 = vmul.f32 %v450, 0.07780742
    %v483 = vmul.f32 %v451, 0.07780742
    %v484 = vmul.f32 %v452, 0.07780742
    %v485 = vmul.f32 %v453, 0.07780742
    %v486 = vmul.f32 %v454, 0.07780742
    %v487 = vmul.f32 %v455, 0.07780742
    %v488 = vmul.f32 %v456, 0.07780742
    %v489 = vmul.f32 %v457, 0.07780742
    %v490 = vmul.f32 %v458, 0.07780742
    %v491 = vmul.f32 %v459, 0.07780742
    %v492 = vadd.f32 %v396, %v460
    %v493 = vadd.f32 %v397, %v461
    %v494 = vadd.f32 %v398, %v462
    %v495 = vadd.f32 %v399, %v463
    %v496 = vadd.f32 %v400, %v464
    %v497 = vadd.f32 %v401, %v465
    %v498 = vadd.f32 %v402, %v466
    %v499 = vadd.f32 %v403, %v467
    %v500 = vadd.f32 %v404, %v468
    %v501 = vadd.f32 %v405, %v469
    %v502 = vadd.f32 %v406, %v470
    %v503 = vadd.f32 %v407, %v471
    %v504 = vadd.f32 %v408, %v472
    %v505 = vadd.f32 %v409, %v473
    %v506 = vadd.f32 %v410, %v474
    %v507 = vadd.f32 %v411, %v475
    %v508 = vadd.f32 %v412, %v476
    %v509 = vadd.f32 %v413, %v477
    %v510 = vadd.f32 %v414, %v478
    %v511 = vadd.f32 %v415, %v479
    %v512 = vadd.f32 %v416, %v480
    %v513 = vadd.f32 %v417, %v481
    %v514 = vadd.f32 %v418, %v482
    %v515 = vadd.f32 %v419, %v483
    %v516 = vadd.f32 %v420, %v484
    %v517 = vadd.f32 %v421, %v485
    %v518 = vadd.f32 %v422, %v486
    %v519 = vadd.f32 %v423, %v487
    %v520 = vadd.f32 %v424, %v488
    %v521 = vadd.f32 %v425, %v489
    %v522 = vadd.f32 %v426, %v490
    %v523 = vadd.f32 %v427, %v491
    %v524 = vld [vmem:[%s57 + $0x1] sm:$0xff]
    %v525 = vld [vmem:[%s57 + $0x9] sm:$0xff]
    %v526 = vld [vmem:[%s57 + $0x19] sm:$0xff]
    %v527 = vld [vmem:[%s57 + $0x21] sm:$0xff]
    %v528 = vld [vmem:[%s57 + $0x31] sm:$0xff]
    %v529 = vld [vmem:[%s57 + $0x39] sm:$0xff]
    %v530 = vld [vmem:[%s57 + $0x49] sm:$0xff]
    %v531 = vld [vmem:[%s57 + $0x51] sm:$0xff]
    %v532 = vld [vmem:[%s57 + $0x61] sm:$0xff]
    %v533 = vld [vmem:[%s57 + $0x69] sm:$0xff]
    %v534 = vld [vmem:[%s57 + $0x79] sm:$0xff]
    %v535 = vld [vmem:[%s57 + $0x81] sm:$0xff]
    %v536 = vld [vmem:[%s57 + $0x91] sm:$0xff]
    %v537 = vld [vmem:[%s57 + $0x99] sm:$0xff]
    %v538 = vld [vmem:[%s57 + $0xa9] sm:$0xff]
    %v539 = vld [vmem:[%s57 + $0xb1] sm:$0xff]
    %v540 = vld [vmem:[%s57 + $0xc1] sm:$0xff]
    %v541 = vld [vmem:[%s57 + $0xc9] sm:$0xff]
    %v542 = vld [vmem:[%s57 + $0xd9] sm:$0xff]
    %v543 = vld [vmem:[%s57 + $0xe1] sm:$0xff]
    %v544 = vld [vmem:[%s57 + $0xf1] sm:$0xff]
    %v545 = vld [vmem:[%s57 + $0xf9] sm:$0xff]
    %v546 = vld [vmem:[%s57 + $0x109] sm:$0xff]
    %v547 = vld [vmem:[%s57 + $0x111] sm:$0xff]
    %v548 = vld [vmem:[%s57 + $0x121] sm:$0xff]
    %v549 = vld [vmem:[%s57 + $0x129] sm:$0xff]
    %v550 = vld [vmem:[%s57 + $0x139] sm:$0xff]
    %v551 = vld [vmem:[%s57 + $0x141] sm:$0xff]
    %v552 = vld [vmem:[%s57 + $0x151] sm:$0xff]
    %v553 = vld [vmem:[%s57 + $0x159] sm:$0xff]
    %v554 = vld [vmem:[%s57 + $0x169] sm:$0xff]
    %v555 = vld [vmem:[%s57 + $0x171] sm:$0xff]
    %v556 = vmul.f32 %v524, 0.5
    %v557 = vmul.f32 %v525, 0.5
    %v558 = vmul.f32 %v526, 0.5
    %v559 = vmul.f32 %v527, 0.5
    %v560 = vmul.f32 %v528, 0.5
    %v561 = vmul.f32 %v529, 0.5
    %v562 = vmul.f32 %v530, 0.5
    %v563 = vmul.f32 %v531, 0.5
    %v564 = vmul.f32 %v532, 0.5
    %v565 = vmul.f32 %v533, 0.5
    %v566 = vmul.f32 %v534, 0.5
    %v567 = vmul.f32 %v535, 0.5
    %v568 = vmul.f32 %v536, 0.5
    %v569 = vmul.f32 %v537, 0.5
    %v570 = vmul.f32 %v538, 0.5
    %v571 = vmul.f32 %v539, 0.5
    %v572 = vmul.f32 %v540, 0.5
    %v573 = vmul.f32 %v541, 0.5
    %v574 = vmul.f32 %v542, 0.5
    %v575 = vmul.f32 %v543, 0.5
    %v576 = vmul.f32 %v544, 0.5
    %v577 = vmul.f32 %v545, 0.5
    %v578 = vmul.f32 %v546, 0.5
    %v579 = vmul.f32 %v547, 0.5
    %v580 = vmul.f32 %v548, 0.5
    %v581 = vmul.f32 %v549, 0.5
    %v582 = vmul.f32 %v550, 0.5
    %v583 = vmul.f32 %v551, 0.5
    %v584 = vmul.f32 %v552, 0.5
    %v585 = vmul.f32 %v553, 0.5
    %v586 = vmul.f32 %v554, 0.5
    %v587 = vmul.f32 %v555, 0.5
    %v588 = vadd.f32 %v492, %v556
    %v589 = vadd.f32 %v493, %v557
    %v590 = vadd.f32 %v494, %v558
    %v591 = vadd.f32 %v495, %v559
    %v592 = vadd.f32 %v496, %v560
    %v593 = vadd.f32 %v497, %v561
    %v594 = vadd.f32 %v498, %v562
    %v595 = vadd.f32 %v499, %v563
    %v596 = vadd.f32 %v500, %v564
    %v597 = vadd.f32 %v501, %v565
    %v598 = vadd.f32 %v502, %v566
    %v599 = vadd.f32 %v503, %v567
    %v600 = vadd.f32 %v504, %v568
    %v601 = vadd.f32 %v505, %v569
    %v602 = vadd.f32 %v506, %v570
    %v603 = vadd.f32 %v507, %v571
    %v604 = vadd.f32 %v508, %v572
    %v605 = vadd.f32 %v509, %v573
    %v606 = vadd.f32 %v510, %v574
    %v607 = vadd.f32 %v511, %v575
    %v608 = vadd.f32 %v512, %v576
    %v609 = vadd.f32 %v513, %v577
    %v610 = vadd.f32 %v514, %v578
    %v611 = vadd.f32 %v515, %v579
    %v612 = vadd.f32 %v516, %v580
    %v613 = vadd.f32 %v517, %v581
    %v614 = vadd.f32 %v518, %v582
    %v615 = vadd.f32 %v519, %v583
    %v616 = vadd.f32 %v520, %v584
    %v617 = vadd.f32 %v521, %v585
    %v618 = vadd.f32 %v522, %v586
    %v619 = vadd.f32 %v523, %v587
    %v620 = vld [vmem:[%s57 + $0x2] sm:$0xff]
    %v621 = vld [vmem:[%s57 + $0xa] sm:$0xff]
    %v622 = vld [vmem:[%s57 + $0x1a] sm:$0xff]
    %v623 = vld [vmem:[%s57 + $0x22] sm:$0xff]
    %v624 = vld [vmem:[%s57 + $0x32] sm:$0xff]
    %v625 = vld [vmem:[%s57 + $0x3a] sm:$0xff]
    %v626 = vld [vmem:[%s57 + $0x4a] sm:$0xff]
    %v627 = vld [vmem:[%s57 + $0x52] sm:$0xff]
    %v628 = vld [vmem:[%s57 + $0x62] sm:$0xff]
    %v629 = vld [vmem:[%s57 + $0x6a] sm:$0xff]
    %v630 = vld [vmem:[%s57 + $0x7a] sm:$0xff]
    %v631 = vld [vmem:[%s57 + $0x82] sm:$0xff]
    %v632 = vld [vmem:[%s57 + $0x92] sm:$0xff]
    %v633 = vld [vmem:[%s57 + $0x9a] sm:$0xff]
    %v634 = vld [vmem:[%s57 + $0xaa] sm:$0xff]
    %v635 = vld [vmem:[%s57 + $0xb2] sm:$0xff]
    %v636 = vld [vmem:[%s57 + $0xc2] sm:$0xff]
    %v637 = vld [vmem:[%s57 + $0xca] sm:$0xff]
    %v638 = vld [vmem:[%s57 + $0xda] sm:$0xff]
    %v639 = vld [vmem:[%s57 + $0xe2] sm:$0xff]
    %v640 = vld [vmem:[%s57 + $0xf2] sm:$0xff]
    %v641 = vld [vmem:[%s57 + $0xfa] sm:$0xff]
    %v642 = vld [vmem:[%s57 + $0x10a] sm:$0xff]
    %v643 = vld [vmem:[%s57 + $0x112] sm:$0xff]
    %v644 = vld [vmem:[%s57 + $0x122] sm:$0xff]
    %v645 = vld [vmem:[%s57 + $0x12a] sm:$0xff]
    %v646 = vld [vmem:[%s57 + $0x13a] sm:$0xff]
    %v647 = vld [vmem:[%s57 + $0x142] sm:$0xff]
    %v648 = vld [vmem:[%s57 + $0x152] sm:$0xff]
    %v649 = vld [vmem:[%s57 + $0x15a] sm:$0xff]
    %v650 = vld [vmem:[%s57 + $0x16a] sm:$0xff]
    %v651 = vld [vmem:[%s57 + $0x172] sm:$0xff]
    %v652 = vmul.f32 %v620, 0.07780742
    %v653 = vmul.f32 %v621, 0.07780742
    %v654 = vmul.f32 %v622, 0.07780742
    %v655 = vmul.f32 %v623, 0.07780742
    %v656 = vmul.f32 %v624, 0.07780742
    %v657 = vmul.f32 %v625, 0.07780742
    %v658 = vmul.f32 %v626, 0.07780742
    %v659 = vmul.f32 %v627, 0.07780742
    %v660 = vmul.f32 %v628, 0.07780742
    %v661 = vmul.f32 %v629, 0.07780742
    %v662 = vmul.f32 %v630, 0.07780742
    %v663 = vmul.f32 %v631, 0.07780742
    %v664 = vmul.f32 %v632, 0.07780742
    %v665 = vmul.f32 %v633, 0.07780742
    %v666 = vmul.f32 %v634, 0.07780742
    %v667 = vmul.f32 %v635, 0.07780742
    %v668 = vmul.f32 %v636, 0.07780742
    %v669 = vmul.f32 %v637, 0.07780742
    %v670 = vmul.f32 %v638, 0.07780742
    %v671 = vmul.f32 %v639, 0.07780742
    %v672 = vmul.f32 %v640, 0.07780742
    %v673 = vmul.f32 %v641, 0.07780742
    %v674 = vmul.f32 %v642, 0.07780742
    %v675 = vmul.f32 %v643, 0.07780742
    %v676 = vmul.f32 %v644, 0.07780742
    %v677 = vmul.f32 %v645, 0.07780742
    %v678 = vmul.f32 %v646, 0.07780742
    %v679 = vmul.f32 %v647, 0.07780742
    %v680 = vmul.f32 %v648, 0.07780742
    %v681 = vmul.f32 %v649, 0.07780742
    %v682 = vmul.f32 %v650, 0.07780742
    %v683 = vmul.f32 %v651, 0.07780742
    %v684 = vadd.f32 %v588, %v652
    %v685 = vadd.f32 %v589, %v653
    %v686 = vadd.f32 %v590, %v654
    %v687 = vadd.f32 %v591, %v655
    %v688 = vadd.f32 %v592, %v656
    %v689 = vadd.f32 %v593, %v657
    %v690 = vadd.f32 %v594, %v658
    %v691 = vadd.f32 %v595, %v659
    %v692 = vadd.f32 %v596, %v660
    %v693 = vadd.f32 %v597, %v661
    %v694 = vadd.f32 %v598, %v662
    %v695 = vadd.f32 %v599, %v663
    %v696 = vadd.f32 %v600, %v664
    %v697 = vadd.f32 %v601, %v665
    %v698 = vadd.f32 %v602, %v666
    %v699 = vadd.f32 %v603, %v667
    %v700 = vadd.f32 %v604, %v668
    %v701 = vadd.f32 %v605, %v669
    %v702 = vadd.f32 %v606, %v670
    %v703 = vadd.f32 %v607, %v671
    %v704 = vadd.f32 %v608, %v672
    %v705 = vadd.f32 %v609, %v673
    %v706 = vadd.f32 %v610, %v674
    %v707 = vadd.f32 %v611, %v675
    %v708 = vadd.f32 %v612, %v676
    %v709 = vadd.f32 %v613, %v677
    %v710 = vadd.f32 %v614, %v678
    %v711 = vadd.f32 %v615, %v679
    %v712 = vadd.f32 %v616, %v680
    %v713 = vadd.f32 %v617, %v681
    %v714 = vadd.f32 %v618, %v682
    %v715 = vadd.f32 %v619, %v683
    %s716 = scalar_lea.vmem [#allocation2], 48
    %v717 = vld [vmem:[%s716] sm:$0xff]
    %v718 = vld [vmem:[%s716 + $0x8] sm:$0xff]
    %v719 = vld [vmem:[%s716 + $0x18] sm:$0xff]
    %v720 = vld [vmem:[%s716 + $0x20] sm:$0xff]
    %v721 = vld [vmem:[%s716 + $0x30] sm:$0xff]
    %v722 = vld [vmem:[%s716 + $0x38] sm:$0xff]
    %v723 = vld [vmem:[%s716 + $0x48] sm:$0xff]
    %v724 = vld [vmem:[%s716 + $0x50] sm:$0xff]
    %v725 = vld [vmem:[%s716 + $0x60] sm:$0xff]
    %v726 = vld [vmem:[%s716 + $0x68] sm:$0xff]
    %v727 = vld [vmem:[%s716 + $0x78] sm:$0xff]
    %v728 = vld [vmem:[%s716 + $0x80] sm:$0xff]
    %v729 = vld [vmem:[%s716 + $0x90] sm:$0xff]
    %v730 = vld [vmem:[%s716 + $0x98] sm:$0xff]
    %v731 = vld [vmem:[%s716 + $0xa8] sm:$0xff]
    %v732 = vld [vmem:[%s716 + $0xb0] sm:$0xff]
    %v733 = vld [vmem:[%s716 + $0xc0] sm:$0xff]
    %v734 = vld [vmem:[%s716 + $0xc8] sm:$0xff]
    %v735 = vld [vmem:[%s716 + $0xd8] sm:$0xff]
    %v736 = vld [vmem:[%s716 + $0xe0] sm:$0xff]
    %v737 = vld [vmem:[%s716 + $0xf0] sm:$0xff]
    %v738 = vld [vmem:[%s716 + $0xf8] sm:$0xff]
    %v739 = vld [vmem:[%s716 + $0x108] sm:$0xff]
    %v740 = vld [vmem:[%s716 + $0x110] sm:$0xff]
    %v741 = vld [vmem:[%s716 + $0x120] sm:$0xff]
    %v742 = vld [vmem:[%s716 + $0x128] sm:$0xff]
    %v743 = vld [vmem:[%s716 + $0x138] sm:$0xff]
    %v744 = vld [vmem:[%s716 + $0x140] sm:$0xff]
    %v745 = vld [vmem:[%s716 + $0x150] sm:$0xff]
    %v746 = vld [vmem:[%s716 + $0x158] sm:$0xff]
    %v747 = vld [vmem:[%s716 + $0x168] sm:$0xff]
    %v748 = vld [vmem:[%s716 + $0x170] sm:$0xff]
    %v749 = vmul.f32 %v717, 0.047192585
    %v750 = vmul.f32 %v718, 0.047192585
    %v751 = vmul.f32 %v719, 0.047192585
    %v752 = vmul.f32 %v720, 0.047192585
    %v753 = vmul.f32 %v721, 0.047192585
    %v754 = vmul.f32 %v722, 0.047192585
    %v755 = vmul.f32 %v723, 0.047192585
    %v756 = vmul.f32 %v724, 0.047192585
    %v757 = vmul.f32 %v725, 0.047192585
    %v758 = vmul.f32 %v726, 0.047192585
    %v759 = vmul.f32 %v727, 0.047192585
    %v760 = vmul.f32 %v728, 0.047192585
    %v761 = vmul.f32 %v729, 0.047192585
    %v762 = vmul.f32 %v730, 0.047192585
    %v763 = vmul.f32 %v731, 0.047192585
    %v764 = vmul.f32 %v732, 0.047192585
    %v765 = vmul.f32 %v733, 0.047192585
    %v766 = vmul.f32 %v734, 0.047192585
    %v767 = vmul.f32 %v735, 0.047192585
    %v768 = vmul.f32 %v736, 0.047192585
    %v769 = vmul.f32 %v737, 0.047192585
    %v770 = vmul.f32 %v738, 0.047192585
    %v771 = vmul.f32 %v739, 0.047192585
    %v772 = vmul.f32 %v740, 0.047192585
    %v773 = vmul.f32 %v741, 0.047192585
    %v774 = vmul.f32 %v742, 0.047192585
    %v775 = vmul.f32 %v743, 0.047192585
    %v776 = vmul.f32 %v744, 0.047192585
    %v777 = vmul.f32 %v745, 0.047192585
    %v778 = vmul.f32 %v746, 0.047192585
    %v779 = vmul.f32 %v747, 0.047192585
    %v780 = vmul.f32 %v748, 0.047192585
    %v781 = vadd.f32 %v684, %v749
    %v782 = vadd.f32 %v685, %v750
    %v783 = vadd.f32 %v686, %v751
    %v784 = vadd.f32 %v687, %v752
    %v785 = vadd.f32 %v688, %v753
    %v786 = vadd.f32 %v689, %v754
    %v787 = vadd.f32 %v690, %v755
    %v788 = vadd.f32 %v691, %v756
    %v789 = vadd.f32 %v692, %v757
    %v790 = vadd.f32 %v693, %v758
    %v791 = vadd.f32 %v694, %v759
    %v792 = vadd.f32 %v695, %v760
    %v793 = vadd.f32 %v696, %v761
    %v794 = vadd.f32 %v697, %v762
    %v795 = vadd.f32 %v698, %v763
    %v796 = vadd.f32 %v699, %v764
    %v797 = vadd.f32 %v700, %v765
    %v798 = vadd.f32 %v701, %v766
    %v799 = vadd.f32 %v702, %v767
    %v800 = vadd.f32 %v703, %v768
    %v801 = vadd.f32 %v704, %v769
    %v802 = vadd.f32 %v705, %v770
    %v803 = vadd.f32 %v706, %v771
    %v804 = vadd.f32 %v707, %v772
    %v805 = vadd.f32 %v708, %v773
    %v806 = vadd.f32 %v709, %v774
    %v807 = vadd.f32 %v710, %v775
    %v808 = vadd.f32 %v711, %v776
    %v809 = vadd.f32 %v712, %v777
    %v810 = vadd.f32 %v713, %v778
    %v811 = vadd.f32 %v714, %v779
    %v812 = vadd.f32 %v715, %v780
    %v813 = vld [vmem:[%s716 + $0x1] sm:$0xff]
    %v814 = vld [vmem:[%s716 + $0x9] sm:$0xff]
    %v815 = vld [vmem:[%s716 + $0x19] sm:$0xff]
    %v816 = vld [vmem:[%s716 + $0x21] sm:$0xff]
    %v817 = vld [vmem:[%s716 + $0x31] sm:$0xff]
    %v818 = vld [vmem:[%s716 + $0x39] sm:$0xff]
    %v819 = vld [vmem:[%s716 + $0x49] sm:$0xff]
    %v820 = vld [vmem:[%s716 + $0x51] sm:$0xff]
    %v821 = vld [vmem:[%s716 + $0x61] sm:$0xff]
    %v822 = vld [vmem:[%s716 + $0x69] sm:$0xff]
    %v823 = vld [vmem:[%s716 + $0x79] sm:$0xff]
    %v824 = vld [vmem:[%s716 + $0x81] sm:$0xff]
    %v825 = vld [vmem:[%s716 + $0x91] sm:$0xff]
    %v826 = vld [vmem:[%s716 + $0x99] sm:$0xff]
    %v827 = vld [vmem:[%s716 + $0xa9] sm:$0xff]
    %v828 = vld [vmem:[%s716 + $0xb1] sm:$0xff]
    %v829 = vld [vmem:[%s716 + $0xc1] sm:$0xff]
    %v830 = vld [vmem:[%s716 + $0xc9] sm:$0xff]
    %v831 = vld [vmem:[%s716 + $0xd9] sm:$0xff]
    %v832 = vld [vmem:[%s716 + $0xe1] sm:$0xff]
    %v833 = vld [vmem:[%s716 + $0xf1] sm:$0xff]
    %v834 = vld [vmem:[%s716 + $0xf9] sm:$0xff]
    %v835 = vld [vmem:[%s716 + $0x109] sm:$0xff]
    %v836 = vld [vmem:[%s716 + $0x111] sm:$0xff]
    %v837 = vld [vmem:[%s716 + $0x121] sm:$0xff]
    %v838 = vld [vmem:[%s716 + $0x129] sm:$0xff]
    %v839 = vld [vmem:[%s716 + $0x139] sm:$0xff]
    %v840 = vld [vmem:[%s716 + $0x141] sm:$0xff]
    %v841 = vld [vmem:[%s716 + $0x151] sm:$0xff]
    %v842 = vld [vmem:[%s716 + $0x159] sm:$0xff]
    %v843 = vld [vmem:[%s716 + $0x169] sm:$0xff]
    %v844 = vld [vmem:[%s716 + $0x171] sm:$0xff]
    %v845 = vmul.f32 %v813, 0.07780742
    %v846 = vmul.f32 %v814, 0.07780742
    %v847 = vmul.f32 %v815, 0.07780742
    %v848 = vmul.f32 %v816, 0.07780742
    %v849 = vmul.f32 %v817, 0.07780742
    %v850 = vmul.f32 %v818, 0.07780742
    %v851 = vmul.f32 %v819, 0.07780742
    %v852 = vmul.f32 %v820, 0.07780742
    %v853 = vmul.f32 %v821, 0.07780742
    %v854 = vmul.f32 %v822, 0.07780742
    %v855 = vmul.f32 %v823, 0.07780742
    %v856 = vmul.f32 %v824, 0.07780742
    %v857 = vmul.f32 %v825, 0.07780742
    %v858 = vmul.f32 %v826, 0.07780742
    %v859 = vmul.f32 %v827, 0.07780742
    %v860 = vmul.f32 %v828, 0.07780742
    %v861 = vmul.f32 %v829, 0.07780742
    %v862 = vmul.f32 %v830, 0.07780742
    %v863 = vmul.f32 %v831, 0.07780742
    %v864 = vmul.f32 %v832, 0.07780742
    %v865 = vmul.f32 %v833, 0.07780742
    %v866 = vmul.f32 %v834, 0.07780742
    %v867 = vmul.f32 %v835, 0.07780742
    %v868 = vmul.f32 %v836, 0.07780742
    %v869 = vmul.f32 %v837, 0.07780742
    %v870 = vmul.f32 %v838, 0.07780742
    %v871 = vmul.f32 %v839, 0.07780742
    %v872 = vmul.f32 %v840, 0.07780742
    %v873 = vmul.f32 %v841, 0.07780742
    %v874 = vmul.f32 %v842, 0.07780742
    %v875 = vmul.f32 %v843, 0.07780742
    %v876 = vmul.f32 %v844, 0.07780742
    %v877 = vadd.f32 %v781, %v845
    %v878 = vadd.f32 %v782, %v846
    %v879 = vadd.f32 %v783, %v847
    %v880 = vadd.f32 %v784, %v848
    %v881 = vadd.f32 %v785, %v849
    %v882 = vadd.f32 %v786, %v850
    %v883 = vadd.f32 %v787, %v851
    %v884 = vadd.f32 %v788, %v852
    %v885 = vadd.f32 %v789, %v853
    %v886 = vadd.f32 %v790, %v854
    %v887 = vadd.f32 %v791, %v855
    %v888 = vadd.f32 %v792, %v856
    %v889 = vadd.f32 %v793, %v857
    %v890 = vadd.f32 %v794, %v858
    %v891 = vadd.f32 %v795, %v859
    %v892 = vadd.f32 %v796, %v860
    %v893 = vadd.f32 %v797, %v861
    %v894 = vadd.f32 %v798, %v862
    %v895 = vadd.f32 %v799, %v863
    %v896 = vadd.f32 %v800, %v864
    %v897 = vadd.f32 %v801, %v865
    %v898 = vadd.f32 %v802, %v866
    %v899 = vadd.f32 %v803, %v867
    %v900 = vadd.f32 %v804, %v868
    %v901 = vadd.f32 %v805, %v869
    %v902 = vadd.f32 %v806, %v870
    %v903 = vadd.f32 %v807, %v871
    %v904 = vadd.f32 %v808, %v872
    %v905 = vadd.f32 %v809, %v873
    %v906 = vadd.f32 %v810, %v874
    %v907 = vadd.f32 %v811, %v875
    %v908 = vadd.f32 %v812, %v876
    %v909 = vld [vmem:[%s716 + $0x2] sm:$0xff]
    %v910 = vld [vmem:[%s716 + $0xa] sm:$0xff]
    %v911 = vld [vmem:[%s716 + $0x1a] sm:$0xff]
    %v912 = vld [vmem:[%s716 + $0x22] sm:$0xff]
    %v913 = vld [vmem:[%s716 + $0x32] sm:$0xff]
    %v914 = vld [vmem:[%s716 + $0x3a] sm:$0xff]
    %v915 = vld [vmem:[%s716 + $0x4a] sm:$0xff]
    %v916 = vld [vmem:[%s716 + $0x52] sm:$0xff]
    %v917 = vld [vmem:[%s716 + $0x62] sm:$0xff]
    %v918 = vld [vmem:[%s716 + $0x6a] sm:$0xff]
    %v919 = vld [vmem:[%s716 + $0x7a] sm:$0xff]
    %v920 = vld [vmem:[%s716 + $0x82] sm:$0xff]
    %v921 = vld [vmem:[%s716 + $0x92] sm:$0xff]
    %v922 = vld [vmem:[%s716 + $0x9a] sm:$0xff]
    %v923 = vld [vmem:[%s716 + $0xaa] sm:$0xff]
    %v924 = vld [vmem:[%s716 + $0xb2] sm:$0xff]
    %v925 = vld [vmem:[%s716 + $0xc2] sm:$0xff]
    %v926 = vld [vmem:[%s716 + $0xca] sm:$0xff]
    %v927 = vld [vmem:[%s716 + $0xda] sm:$0xff]
    %v928 = vld [vmem:[%s716 + $0xe2] sm:$0xff]
    %v929 = vld [vmem:[%s716 + $0xf2] sm:$0xff]
    %v930 = vld [vmem:[%s716 + $0xfa] sm:$0xff]
    %v931 = vld [vmem:[%s716 + $0x10a] sm:$0xff]
    %v932 = vld [vmem:[%s716 + $0x112] sm:$0xff]
    %v933 = vld [vmem:[%s716 + $0x122] sm:$0xff]
    %v934 = vld [vmem:[%s716 + $0x12a] sm:$0xff]
    %v935 = vld [vmem:[%s716 + $0x13a] sm:$0xff]
    %v936 = vld [vmem:[%s716 + $0x142] sm:$0xff]
    %v937 = vld [vmem:[%s716 + $0x152] sm:$0xff]
    %v938 = vld [vmem:[%s716 + $0x15a] sm:$0xff]
    %v939 = vld [vmem:[%s716 + $0x16a] sm:$0xff]
    %v940 = vld [vmem:[%s716 + $0x172] sm:$0xff]
    %v941 = vmul.f32 %v909, 0.047192585
    %v942 = vmul.f32 %v910, 0.047192585
    %v943 = vmul.f32 %v911, 0.047192585
    %v944 = vmul.f32 %v912, 0.047192585
    %v945 = vmul.f32 %v913, 0.047192585
    %v946 = vmul.f32 %v914, 0.047192585
    %v947 = vmul.f32 %v915, 0.047192585
    %v948 = vmul.f32 %v916, 0.047192585
    %v949 = vmul.f32 %v917, 0.047192585
    %v950 = vmul.f32 %v918, 0.047192585
    %v951 = vmul.f32 %v919, 0.047192585
    %v952 = vmul.f32 %v920, 0.047192585
    %v953 = vmul.f32 %v921, 0.047192585
    %v954 = vmul.f32 %v922, 0.047192585
    %v955 = vmul.f32 %v923, 0.047192585
    %v956 = vmul.f32 %v924, 0.047192585
    %v957 = vmul.f32 %v925, 0.047192585
    %v958 = vmul.f32 %v926, 0.047192585
    %v959 = vmul.f32 %v927, 0.047192585
    %v960 = vmul.f32 %v928, 0.047192585
    %v961 = vmul.f32 %v929, 0.047192585
    %v962 = vmul.f32 %v930, 0.047192585
    %v963 = vmul.f32 %v931, 0.047192585
    %v964 = vmul.f32 %v932, 0.047192585
    %v965 = vmul.f32 %v933, 0.047192585
    %v966 = vmul.f32 %v934, 0.047192585
    %v967 = vmul.f32 %v935, 0.047192585
    %v968 = vmul.f32 %v936, 0.047192585
    %v969 = vmul.f32 %v937, 0.047192585
    %v970 = vmul.f32 %v938, 0.047192585
    %v971 = vmul.f32 %v939, 0.047192585
    %v972 = vmul.f32 %v940, 0.047192585
    %v973 = vadd.f32 %v877, %v941
    %v974 = vadd.f32 %v878, %v942
    %v975 = vadd.f32 %v879, %v943
    %v976 = vadd.f32 %v880, %v944
    %v977 = vadd.f32 %v881, %v945
    %v978 = vadd.f32 %v882, %v946
    %v979 = vadd.f32 %v883, %v947
    %v980 = vadd.f32 %v884, %v948
    %v981 = vadd.f32 %v885, %v949
    %v982 = vadd.f32 %v886, %v950
    %v983 = vadd.f32 %v887, %v951
    %v984 = vadd.f32 %v888, %v952
    %v985 = vadd.f32 %v889, %v953
    %v986 = vadd.f32 %v890, %v954
    %v987 = vadd.f32 %v891, %v955
    %v988 = vadd.f32 %v892, %v956
    %v989 = vadd.f32 %v893, %v957
    %v990 = vadd.f32 %v894, %v958
    %v991 = vadd.f32 %v895, %v959
    %v992 = vadd.f32 %v896, %v960
    %v993 = vadd.f32 %v897, %v961
    %v994 = vadd.f32 %v898, %v962
    %v995 = vadd.f32 %v899, %v963
    %v996 = vadd.f32 %v900, %v964
    %v997 = vadd.f32 %v901, %v965
    %v998 = vadd.f32 %v902, %v966
    %v999 = vadd.f32 %v903, %v967
    %v1000 = vadd.f32 %v904, %v968
    %v1001 = vadd.f32 %v905, %v969
    %v1002 = vadd.f32 %v906, %v970
    %v1003 = vadd.f32 %v907, %v971
    %v1004 = vadd.f32 %v908, %v972
    %1005 = vst [vmem:[#allocation6] sm:$0xff] %v973
    %1006 = vst [vmem:[#allocation6 + $0x8] sm:$0xff] %v974
    %1007 = vst [vmem:[#allocation6 + $0x10] sm:$0xff] %v975
    %1008 = vst [vmem:[#allocation6 + $0x18] sm:$0xff] %v976
    %1009 = vst [vmem:[#allocation6 + $0x20] sm:$0xff] %v977
    %1010 = vst [vmem:[#allocation6 + $0x28] sm:$0xff] %v978
    %1011 = vst [vmem:[#allocation6 + $0x30] sm:$0xff] %v979
    %1012 = vst [vmem:[#allocation6 + $0x38] sm:$0xff] %v980
    %1013 = vst [vmem:[#allocation6 + $0x40] sm:$0xff] %v981
    %1014 = vst [vmem:[#allocation6 + $0x48] sm:$0xff] %v982
    %1015 = vst [vmem:[#allocation6 + $0x50] sm:$0xff] %v983
    %1016 = vst [vmem:[#allocation6 + $0x58] sm:$0xff] %v984
    %1017 = vst [vmem:[#allocation6 + $0x60] sm:$0xff] %v985
    %1018 = vst [vmem:[#allocation6 + $0x68] sm:$0xff] %v986
    %1019 = vst [vmem:[#allocation6 + $0x70] sm:$0xff] %v987
    %1020 = vst [vmem:[#allocation6 + $0x78] sm:$0xff] %v988
    %1021 = vst [vmem:[#allocation6 + $0x80] sm:$0xff] %v989
    %1022 = vst [vmem:[#allocation6 + $0x88] sm:$0xff] %v990
    %1023 = vst [vmem:[#allocation6 + $0x90] sm:$0xff] %v991
    %1024 = vst [vmem:[#allocation6 + $0x98] sm:$0xff] %v992
    %1025 = vst [vmem:[#allocation6 + $0xa0] sm:$0xff] %v993
    %1026 = vst [vmem:[#allocation6 + $0xa8] sm:$0xff] %v994
    %1027 = vst [vmem:[#allocation6 + $0xb0] sm:$0xff] %v995
    %1028 = vst [vmem:[#allocation6 + $0xb8] sm:$0xff] %v996
    %1029 = vst [vmem:[#allocation6 + $0xc0] sm:$0xff] %v997
    %1030 = vst [vmem:[#allocation6 + $0xc8] sm:$0xff] %v998
    %1031 = vst [vmem:[#allocation6 + $0xd0] sm:$0xff] %v999
    %1032 = vst [vmem:[#allocation6 + $0xd8] sm:$0xff] %v1000
    %1033 = vst [vmem:[#allocation6 + $0xe0] sm:$0xff] %v1001
    %1034 = vst [vmem:[#allocation6 + $0xe8] sm:$0xff] %v1002
    %1035 = vst [vmem:[#allocation6 + $0xf0] sm:$0xff] %v1003
    %1036 = vst [vmem:[#allocation6 + $0xf8] sm:$0xff] %v1004
    // Predicated region
    $region10: #{tpu_custom_call.1} parent=1 // pred_check
      _
    $region11: #{tpu_custom_call.1} parent=1 // pred_check_branch
      %1038 = sbr.rel (0) target = $region13
    $region12: #{tpu_custom_call.1} parent=1 // pred_region
      %1040 = vsyncadd [#allocation5], 0
      %s1041 = sshll.u32 [#allocation6], 4
      %s1042 = int_to_ptr.vmem [resolvable:$true] %s1041
      %s1043 = sshll.u32 %s1, 4
      %s1044 = int_to_ptr.hbm [resolvable:$true] %s1043
      %1049 = dma.vmem_to_hbm [thread:$0]  %s1042, 4096, %s1044, [#allocation5], 128, 128, 8
    $region13: #{tpu_custom_call.1} parent=1 // pred_fallthru
      _
    // Predicated region
    $region14: #{tpu_custom_call.1} parent=1 // pred_check
      _
    $region15: #{tpu_custom_call.1} parent=1 // pred_check_branch
      %1051 = sbr.rel (0) target = $region17
    $region16: #{tpu_custom_call.1} parent=1 // pred_region
      %1053 = dma.done [#allocation5], 4096
    $region17: #{tpu_custom_call.1} parent=1 // pred_fallthru
      _
    %1054 = vsyncpa [#allocation4], 1
    %1055 = vsyncpa [#allocation5], 1

</llo_original>
